<compile_context>
chip_gen: v6e
topology: v6e:2x2x1
jax: 0.10.0
libtpu: 0.0.40
codegen_flags: <defaults>
</compile_context>

<pallas_src>
import functools

import jax
import jax.numpy as jnp
from jax.experimental import pallas as pl
from jax.experimental.pallas import tpu as pltpu


def _round_up(x: int, m: int) -> int:
    return (x + m - 1) // m * m


def _supcon_kernel(anchor_ref, contrast_ref, alab_ref, clab_ref, out_ref,
                   m_ref, l_ref, s_ref, p_ref, *,
                   loss_scale, n_valid, check_cols):
    ia = pl.program_id(0)   # anchor-tile index    ("parallel")
    ic = pl.program_id(1)   # contrast-tile index  ("arbitrary", reduction, last)

    @pl.when(ic == 0)
    def _init():
        m_ref[...] = jnp.full_like(m_ref, -jnp.inf)
        l_ref[...] = jnp.zeros_like(l_ref)
        s_ref[...] = jnp.zeros_like(s_ref)
        p_ref[...] = jnp.zeros_like(p_ref)

    # logits tile: z[i, j] = (anchor_i / T) . contrast_j
    # bf16 x bf16 -> f32 on the MXU, contracting the feature dim of both
    # operands (no transpose of the contrast tile).
    z = jax.lax.dot_general(
        anchor_ref[...], contrast_ref[...],
        dimension_numbers=(((1,), (1,)), ((), ())),
        preferred_element_type=jnp.float32)          # [TILE_A, TILE_N] f32
    tile_a, tile_n = z.shape

    # logits_mask: drop the global diagonal (self-contrast) and padded columns.
    col_ids = jax.lax.broadcasted_iota(jnp.int32, (tile_a, tile_n), 1)
    row_ids = jax.lax.broadcasted_iota(jnp.int32, (tile_a, tile_n), 0)
    logits_mask = (col_ids - row_ids) != (ia * tile_a - ic * tile_n)
    if check_cols:  # static: only emitted when the contrast dim was padded
        logits_mask = jnp.logical_and(logits_mask,
                                      col_ids < (n_valid - ic * tile_n))

    # Positive mask from labels, built per tile (never materialized in HBM).
    pos_mask = jnp.logical_and(alab_ref[...] == clab_ref[...], logits_mask)
    pos_f = pos_mask.astype(jnp.float32)
    lm_f = logits_mask.astype(jnp.float32)

    # Online log-sum-exp over the contrast axis (max over the raw row, like the
    # reference; the shift cancels exactly in the final expression).
    m_prev = m_ref[...]
    m_new = jnp.maximum(m_prev, jnp.max(z, axis=1, keepdims=True))
    alpha = jnp.exp(m_prev - m_new)
    l_ref[...] = alpha * l_ref[...] + jnp.sum(jnp.exp(z - m_new) * lm_f,
                                              axis=1, keepdims=True)
    m_ref[...] = m_new

    # sum(pos_mask * log_prob) = s - log(denominator) * p  (computed at the end)
    s_ref[...] += jnp.sum(pos_f * z, axis=1, keepdims=True)
    p_ref[...] += jnp.sum(pos_f, axis=1, keepdims=True)

    @pl.when(ic == pl.num_programs(1) - 1)
    def _finalize():
        log_denom = m_ref[...] + jnp.log(l_ref[...])
        # Exact divide: runs once per anchor row (O(A) work), so keeping full
        # precision here is free; approx reciprocal is not worth the error.
        mean_log_prob_pos = s_ref[...] / p_ref[...]
        out_ref[...] = -loss_scale * (mean_log_prob_pos - log_denom)


def supcon_loss(features, labels, *,
                temperature=0.07 * 0.5,
                contrast_mode='one',
                base_temperature=0.07,
                tile_a=256, tile_n=1024):
    """JAX/Pallas equivalent of SupConLoss.forward (labels path)."""
    features = features.astype(jnp.float32)
    bsz, n_views, d = features.shape
    labels = labels.reshape(-1).astype(jnp.int32)

    # contrast_feature = cat(unbind(features, dim=1), dim=0) -> [n_views*bsz, d]
    contrast_feature = jnp.transpose(features, (1, 0, 2)).reshape(n_views * bsz, d)
    contrast_labels = jnp.tile(labels, n_views)

    if contrast_mode == 'one':
        anchor_feature = features[:, 0]
        anchor_labels = labels
    elif contrast_mode == 'all':
        anchor_feature = contrast_feature
        anchor_labels = contrast_labels
    else:
        raise ValueError(contrast_mode)

    A = anchor_feature.shape[0]
    N = contrast_feature.shape[0]

    # Tile sizes: multiples of (8, 128) (or the full padded extent if smaller).
    tile_a = min(tile_a, _round_up(A, 8))
    tile_n = min(tile_n, _round_up(N, 128))
    a_pad = _round_up(A, tile_a)
    n_pad = _round_up(N, tile_n)

    # Fold 1/temperature into the anchor operand (A*D elements, fused with the
    # bf16 cast) instead of a full [A,N] scale inside the kernel.
    inv_t = 1.0 / float(temperature)
    anchor_op = (anchor_feature * inv_t).astype(jnp.bfloat16)
    contrast_op = contrast_feature.astype(jnp.bfloat16)

    if a_pad != A:
        anchor_op = jnp.pad(anchor_op, ((0, a_pad - A), (0, 0)))
        anchor_labels = jnp.pad(anchor_labels, (0, a_pad - A), constant_values=-1)
    if n_pad != N:
        contrast_op = jnp.pad(contrast_op, ((0, n_pad - N), (0, 0)))
        contrast_labels = jnp.pad(contrast_labels, (0, n_pad - N), constant_values=-1)

    alab = anchor_labels.reshape(a_pad, 1)
    clab = contrast_labels.reshape(1, n_pad)

    kernel = functools.partial(
        _supcon_kernel,
        loss_scale=float(temperature) / float(base_temperature),
        n_valid=N,
        check_cols=(n_pad != N))

    row_loss = pl.pallas_call(
        kernel,
        out_shape=jax.ShapeDtypeStruct((a_pad, 1), jnp.float32),
        grid=(a_pad // tile_a, n_pad // tile_n),
        in_specs=[
            pl.BlockSpec((tile_a, d), lambda i, j: (i, 0)),   # anchor (scaled, bf16)
            pl.BlockSpec((tile_n, d), lambda i, j: (j, 0)),   # contrast (bf16)
            pl.BlockSpec((tile_a, 1), lambda i, j: (i, 0)),   # anchor labels (i32)
            pl.BlockSpec((1, tile_n), lambda i, j: (0, j)),   # contrast labels (i32)
        ],
        # Per-anchor-row loss; the block index depends only on the anchor axis,
        # so it stays VMEM-resident across the reduction and is stored/DMA'd
        # once per anchor tile (written only on the last contrast step).
        out_specs=pl.BlockSpec((tile_a, 1), lambda i, j: (i, 0)),
        scratch_shapes=[
            pltpu.VMEM((tile_a, 1), jnp.float32),   # running max m
            pltpu.VMEM((tile_a, 1), jnp.float32),   # running denom l
            pltpu.VMEM((tile_a, 1), jnp.float32),   # running sum(pos_mask * logits)
            pltpu.VMEM((tile_a, 1), jnp.float32),   # running sum(pos_mask)
        ],
        compiler_params=pltpu.CompilerParams(
            dimension_semantics=("parallel", "arbitrary")),
    )(anchor_op, contrast_op, alab, clab)

    # Mean over the A real anchor rows (padded rows dropped).  NOTE: anchors
    # with no positive pair yield NaN, exactly like the PyTorch reference
    # (division by mask.sum() == 0).
    return jnp.sum(row_loss[:A, 0]) / A


def _supcon_loss_ref(features, labels, *,
                     temperature=0.07 * 0.5,
                     contrast_mode='one',
                     base_temperature=0.07,
                     matmul_dtype=jnp.float32):
    """Pure-JAX mirror of the PyTorch forward, for verification.

    matmul_dtype=jnp.bfloat16 applies the same operand quantization / 1/T
    folding as the kernel, isolating the kernel logic from MXU precision.
    """
    features = features.astype(jnp.float32)
    bsz, n_views, d = features.shape
    labels = labels.reshape(-1)
    mask = (labels[:, None] == labels[None, :]).astype(jnp.float32)
    contrast_feature = jnp.transpose(features, (1, 0, 2)).reshape(n_views * bsz, d)
    if contrast_mode == 'one':
        anchor_feature = features[:, 0]
        anchor_count = 1
    else:
        anchor_feature = contrast_feature
        anchor_count = n_views

    if matmul_dtype == jnp.float32:
        adc = (anchor_feature @ contrast_feature.T) / temperature
    else:
        adc = jnp.dot((anchor_feature * (1.0 / temperature)).astype(matmul_dtype),
                      contrast_feature.astype(matmul_dtype).T,
                      preferred_element_type=jnp.float32)

    logits = adc - jnp.max(adc, axis=1, keepdims=True)
    mask = jnp.tile(mask, (anchor_count, n_views))
    A, N = mask.shape
    logits_mask = 1.0 - (jnp.arange(A)[:, None] == jnp.arange(N)[None, :]
                         ).astype(jnp.float32)
    mask = mask * logits_mask
    exp_logits = jnp.exp(logits) * logits_mask
    logits = logits * logits_mask
    log_prob = logits - jnp.log(exp_logits.sum(1, keepdims=True))
    mean_log_prob_pos = (mask * log_prob).sum(1) / mask.sum(1)
    loss = -(temperature / base_temperature) * mean_log_prob_pos
    return loss.reshape(anchor_count, bsz).mean()


if __name__ == "__main__":
    key = jax.random.PRNGKey(0)
    k_feat, k_lab = jax.random.split(key)

    bsz, n_views, feat_dim = 8, 2, 32
    features = jax.random.normal(k_feat, (bsz, n_views, feat_dim), dtype=jnp.float32)
    # L2-normalize (typical SupCon usage; keeps logits well-behaved).
    features = features / jnp.linalg.norm(features, axis=-1, keepdims=True)
    labels = jax.random.randint(k_lab, (bsz,), 0, 3, dtype=jnp.int32)

    for mode in ('one', 'all'):
        loss = jax.block_until_ready(supcon_loss(features, labels, contrast_mode=mode))

        # Precision-matched reference (same bf16 matmul operands as the kernel).
        ref_bf16 = _supcon_loss_ref(features, labels, contrast_mode=mode,
                                    matmul_dtype=jnp.bfloat16)
        # Full-f32 reference (exact module math); loose tol covers bf16 operands.
        ref_f32 = _supcon_loss_ref(features, labels, contrast_mode=mode,
                                   matmul_dtype=jnp.float32)

        assert bool(jnp.isfinite(loss)), (mode, loss)
        assert jnp.allclose(loss, ref_bf16, rtol=1e-4, atol=1e-3), (mode, loss, ref_bf16)
        assert jnp.allclose(loss, ref_f32, rtol=5e-2, atol=2e-1), (mode, loss, ref_f32)

    print("KERNEL_OK")
</pallas_src>

<mosaic_0001>
module attributes {stable_mosaic.version = 11 : i64} {
  func.func @_supcon_kernel(%arg0: i32, %arg1: i32, %arg2: memref<8x32xbf16, #tpu.memory_space<vmem>>, %arg3: memref<128x32xbf16, #tpu.memory_space<vmem>>, %arg4: memref<8x1xi32, #tpu.memory_space<vmem>>, %arg5: memref<1x128xi32, #tpu.memory_space<vmem>>, %arg6: memref<8x1xf32, #tpu.memory_space<vmem>>, %arg7: memref<8x1xf32, #tpu.memory_space<vmem>>, %arg8: memref<8x1xf32, #tpu.memory_space<vmem>>, %arg9: memref<8x1xf32, #tpu.memory_space<vmem>>, %arg10: memref<8x1xf32, #tpu.memory_space<vmem>>) attributes {dimension_semantics = [#tpu.dimension_semantics<parallel>, #tpu.dimension_semantics<arbitrary>], iteration_bounds = array<i64: 1, 1>, scalar_prefetch = 0 : i64, scratch_operands = 4 : i64, tpu.core_type = #tpu.core_type<tc>, window_params = [{transform_indices = @transform_0, window_bounds = array<i64: 8, 32>}, {transform_indices = @transform_1, window_bounds = array<i64: 128, 32>}, {transform_indices = @transform_2, window_bounds = array<i64: 8, 1>}, {transform_indices = @transform_3, window_bounds = array<i64: 1, 128>}, {transform_indices = @transform_4, window_bounds = array<i64: 8, 1>}]} {
    %c0_i32 = arith.constant 0 : i32
    %0 = arith.cmpi eq, %arg1, %c0_i32 : i32
    %1 = arith.extui %0 : i1 to i32
    %c0_i32_0 = arith.constant 0 : i32
    %2 = arith.cmpi ne, %1, %c0_i32_0 : i32
    scf.if %2 {
      %cst_31 = arith.constant 0xFF800000 : f32
      %60 = vector.broadcast %cst_31 : f32 to vector<8x1xf32>
      %c0_32 = arith.constant 0 : index
      %c0_33 = arith.constant 0 : index
      %61 = vector.load %arg7[%c0_32, %c0_33] : memref<8x1xf32, #tpu.memory_space<vmem>>, vector<8x1xf32>
      tpu.vector_store %arg7[%c0_32, %c0_33], %60 {strides = array<i32>} : memref<8x1xf32, #tpu.memory_space<vmem>>, vector<8x1xf32>,
      %cst_34 = arith.constant 0.000000e+00 : f32
      %62 = vector.broadcast %cst_34 : f32 to vector<8x1xf32>
      %c0_35 = arith.constant 0 : index
      %c0_36 = arith.constant 0 : index
      %63 = vector.load %arg8[%c0_35, %c0_36] : memref<8x1xf32, #tpu.memory_space<vmem>>, vector<8x1xf32>
      tpu.vector_store %arg8[%c0_35, %c0_36], %62 {strides = array<i32>} : memref<8x1xf32, #tpu.memory_space<vmem>>, vector<8x1xf32>,
      %cst_37 = arith.constant 0.000000e+00 : f32
      %64 = vector.broadcast %cst_37 : f32 to vector<8x1xf32>
      %c0_38 = arith.constant 0 : index
      %c0_39 = arith.constant 0 : index
      %65 = vector.load %arg9[%c0_38, %c0_39] : memref<8x1xf32, #tpu.memory_space<vmem>>, vector<8x1xf32>
      tpu.vector_store %arg9[%c0_38, %c0_39], %64 {strides = array<i32>} : memref<8x1xf32, #tpu.memory_space<vmem>>, vector<8x1xf32>,
      %cst_40 = arith.constant 0.000000e+00 : f32
      %66 = vector.broadcast %cst_40 : f32 to vector<8x1xf32>
      %c0_41 = arith.constant 0 : index
      %c0_42 = arith.constant 0 : index
      %67 = vector.load %arg10[%c0_41, %c0_42] : memref<8x1xf32, #tpu.memory_space<vmem>>, vector<8x1xf32>
      tpu.vector_store %arg10[%c0_41, %c0_42], %66 {strides = array<i32>} : memref<8x1xf32, #tpu.memory_space<vmem>>, vector<8x1xf32>,
    } else {
    }
    %c0 = arith.constant 0 : index
    %c0_1 = arith.constant 0 : index
    %3 = vector.load %arg2[%c0, %c0_1] : memref<8x32xbf16, #tpu.memory_space<vmem>>, vector<8x32xbf16>
    %c0_2 = arith.constant 0 : index
    %c0_3 = arith.constant 0 : index
    %4 = vector.load %arg3[%c0_2, %c0_3] : memref<128x32xbf16, #tpu.memory_space<vmem>>, vector<128x32xbf16>
    %cst = arith.constant dense<0.000000e+00> : vector<8x128xf32>
    %5 = tpu.matmul %3, %4, %cst {dimension_numbers = #tpu.dot_dimension_numbers<[1], [1], [0], [0], [0, 0, 1, 0], [], []>} : vector<8x32xbf16>, vector<128x32xbf16>, vector<8x128xf32> -> vector<8x128xf32>
    %6 = tpu.iota {dimensions = array<i32: 1>} : vector<8x128xi32>
    %7 = tpu.iota {dimensions = array<i32: 0>} : vector<8x128xi32>
    %8 = arith.subi %6, %7 : vector<8x128xi32>
    %c8_i32 = arith.constant 8 : i32
    %9 = arith.muli %arg0, %c8_i32 : i32
    %c128_i32 = arith.constant 128 : i32
    %10 = arith.muli %arg1, %c128_i32 : i32
    %11 = arith.subi %9, %10 : i32
    %12 = vector.broadcast %11 : i32 to vector<8x128xi32>
    %13 = arith.cmpi ne, %8, %12 : vector<8x128xi32>
    %c128_i32_4 = arith.constant 128 : i32
    %14 = arith.muli %arg1, %c128_i32_4 : i32
    %c16_i32 = arith.constant 16 : i32
    %15 = arith.subi %c16_i32, %14 : i32
    %16 = vector.broadcast %15 : i32 to vector<8x128xi32>
    %17 = arith.cmpi slt, %6, %16 : vector<8x128xi32>
    %18 = arith.andi %13, %17 : vector<8x128xi1>
    %c0_5 = arith.constant 0 : index
    %c0_6 = arith.constant 0 : index
    %19 = vector.load %arg4[%c0_5, %c0_6] : memref<8x1xi32, #tpu.memory_space<vmem>>, vector<8x1xi32>
    %c0_7 = arith.constant 0 : index
    %c0_8 = arith.constant 0 : index
    %20 = vector.load %arg5[%c0_7, %c0_8] : memref<1x128xi32, #tpu.memory_space<vmem>>, vector<1x128xi32>
    %21 = vector.broadcast %19 : vector<8x1xi32> to vector<8x128xi32>
    %22 = vector.broadcast %20 : vector<1x128xi32> to vector<8x128xi32>
    %23 = arith.cmpi eq, %21, %22 : vector<8x128xi32>
    %24 = arith.andi %23, %18 : vector<8x128xi1>
    %25 = arith.extui %24 : vector<8x128xi1> to vector<8x128xi32>
    %26 = arith.sitofp %25 : vector<8x128xi32> to vector<8x128xf32>
    %27 = arith.extui %18 : vector<8x128xi1> to vector<8x128xi32>
    %28 = arith.sitofp %27 : vector<8x128xi32> to vector<8x128xf32>
    %c0_9 = arith.constant 0 : index
    %c0_10 = arith.constant 0 : index
    %29 = vector.load %arg7[%c0_9, %c0_10] : memref<8x1xf32, #tpu.memory_space<vmem>>, vector<8x1xf32>
    %cst_11 = arith.constant dense<0xFF800000> : vector<8xf32>
    %30 = vector.multi_reduction <maximumf>, %5, %cst_11 [1] : vector<8x128xf32> to vector<8xf32>
    %31 = vector.shape_cast %30 : vector<8xf32> to vector<8x1xf32>
    %32 = arith.maximumf %29, %31 : vector<8x1xf32>
    %33 = arith.subf %29, %32 : vector<8x1xf32>
    %34 = math.exp %33 : vector<8x1xf32>
    %c0_12 = arith.constant 0 : index
    %c0_13 = arith.constant 0 : index
    %35 = vector.load %arg8[%c0_12, %c0_13] : memref<8x1xf32, #tpu.memory_space<vmem>>, vector<8x1xf32>
    %36 = arith.mulf %34, %35 : vector<8x1xf32>
    %37 = vector.broadcast %32 : vector<8x1xf32> to vector<8x128xf32>
    %38 = arith.subf %5, %37 : vector<8x128xf32>
    %39 = math.exp %38 : vector<8x128xf32>
    %40 = arith.mulf %39, %28 : vector<8x128xf32>
    %cst_14 = arith.constant dense<0.000000e+00> : vector<8xf32>
    %41 = vector.multi_reduction <add>, %40, %cst_14 [1] : vector<8x128xf32> to vector<8xf32>
    %42 = vector.shape_cast %41 : vector<8xf32> to vector<8x1xf32>
    %43 = arith.addf %36, %42 : vector<8x1xf32>
    %c0_15 = arith.constant 0 : index
    %c0_16 = arith.constant 0 : index
    %44 = vector.load %arg8[%c0_15, %c0_16] : memref<8x1xf32, #tpu.memory_space<vmem>>, vector<8x1xf32>
    tpu.vector_store %arg8[%c0_15, %c0_16], %43 {strides = array<i32>} : memref<8x1xf32, #tpu.memory_space<vmem>>, vector<8x1xf32>,
    %c0_17 = arith.constant 0 : index
    %c0_18 = arith.constant 0 : index
    %45 = vector.load %arg7[%c0_17, %c0_18] : memref<8x1xf32, #tpu.memory_space<vmem>>, vector<8x1xf32>
    tpu.vector_store %arg7[%c0_17, %c0_18], %32 {strides = array<i32>} : memref<8x1xf32, #tpu.memory_space<vmem>>, vector<8x1xf32>,
    %c0_19 = arith.constant 0 : index
    %c0_20 = arith.constant 0 : index
    %46 = vector.load %arg9[%c0_19, %c0_20] : memref<8x1xf32, #tpu.memory_space<vmem>>, vector<8x1xf32>
    %47 = arith.mulf %26, %5 : vector<8x128xf32>
    %cst_21 = arith.constant dense<0.000000e+00> : vector<8xf32>
    %48 = vector.multi_reduction <add>, %47, %cst_21 [1] : vector<8x128xf32> to vector<8xf32>
    %49 = vector.shape_cast %48 : vector<8xf32> to vector<8x1xf32>
    %50 = arith.addf %46, %49 : vector<8x1xf32>
    %c0_22 = arith.constant 0 : index
    %c0_23 = arith.constant 0 : index
    %51 = vector.load %arg9[%c0_22, %c0_23] : memref<8x1xf32, #tpu.memory_space<vmem>>, vector<8x1xf32>
    tpu.vector_store %arg9[%c0_22, %c0_23], %50 {strides = array<i32>} : memref<8x1xf32, #tpu.memory_space<vmem>>, vector<8x1xf32>,
    %c0_24 = arith.constant 0 : index
    %c0_25 = arith.constant 0 : index
    %52 = vector.load %arg10[%c0_24, %c0_25] : memref<8x1xf32, #tpu.memory_space<vmem>>, vector<8x1xf32>
    %cst_26 = arith.constant dense<0.000000e+00> : vector<8xf32>
    %53 = vector.multi_reduction <add>, %26, %cst_26 [1] : vector<8x128xf32> to vector<8xf32>
    %54 = vector.shape_cast %53 : vector<8xf32> to vector<8x1xf32>
    %55 = arith.addf %52, %54 : vector<8x1xf32>
    %c0_27 = arith.constant 0 : index
    %c0_28 = arith.constant 0 : index
    %56 = vector.load %arg10[%c0_27, %c0_28] : memref<8x1xf32, #tpu.memory_space<vmem>>, vector<8x1xf32>
    tpu.vector_store %arg10[%c0_27, %c0_28], %55 {strides = array<i32>} : memref<8x1xf32, #tpu.memory_space<vmem>>, vector<8x1xf32>,
    %c0_i32_29 = arith.constant 0 : i32
    %57 = arith.cmpi eq, %arg1, %c0_i32_29 : i32
    %58 = arith.extui %57 : i1 to i32
    %c0_i32_30 = arith.constant 0 : i32
    %59 = arith.cmpi ne, %58, %c0_i32_30 : i32
    scf.if %59 {
      %c0_31 = arith.constant 0 : index
      %c0_32 = arith.constant 0 : index
      %60 = vector.load %arg7[%c0_31, %c0_32] : memref<8x1xf32, #tpu.memory_space<vmem>>, vector<8x1xf32>
      %c0_33 = arith.constant 0 : index
      %c0_34 = arith.constant 0 : index
      %61 = vector.load %arg8[%c0_33, %c0_34] : memref<8x1xf32, #tpu.memory_space<vmem>>, vector<8x1xf32>
      %62 = math.log %61 : vector<8x1xf32>
      %63 = arith.addf %60, %62 : vector<8x1xf32>
      %c0_35 = arith.constant 0 : index
      %c0_36 = arith.constant 0 : index
      %64 = vector.load %arg9[%c0_35, %c0_36] : memref<8x1xf32, #tpu.memory_space<vmem>>, vector<8x1xf32>
      %c0_37 = arith.constant 0 : index
      %c0_38 = arith.constant 0 : index
      %65 = vector.load %arg10[%c0_37, %c0_38] : memref<8x1xf32, #tpu.memory_space<vmem>>, vector<8x1xf32>
      %66 = arith.divf %64, %65 : vector<8x1xf32>
      %67 = arith.subf %66, %63 : vector<8x1xf32>
      %cst_39 = arith.constant -5.000000e-01 : f32
      %68 = vector.broadcast %cst_39 : f32 to vector<8x1xf32>
      %69 = arith.mulf %68, %67 : vector<8x1xf32>
      %c0_40 = arith.constant 0 : index
      %c0_41 = arith.constant 0 : index
      %70 = vector.load %arg6[%c0_40, %c0_41] : memref<8x1xf32, #tpu.memory_space<vmem>>, vector<8x1xf32>
      tpu.vector_store %arg6[%c0_40, %c0_41], %69 {strides = array<i32>} : memref<8x1xf32, #tpu.memory_space<vmem>>, vector<8x1xf32>,
    } else {
    }
    return
  }
  func.func @transform_0(%arg0: i32, %arg1: i32) -> (i32, i32) {
    %c0_i32 = arith.constant 0 : i32
    %c0_i32_0 = arith.constant 0 : i32
    return %arg0, %c0_i32 : i32, i32
  }
  func.func @transform_1(%arg0: i32, %arg1: i32) -> (i32, i32) {
    %c0_i32 = arith.constant 0 : i32
    %c0_i32_0 = arith.constant 0 : i32
    return %arg1, %c0_i32 : i32, i32
  }
  func.func @transform_2(%arg0: i32, %arg1: i32) -> (i32, i32) {
    %c0_i32 = arith.constant 0 : i32
    %c0_i32_0 = arith.constant 0 : i32
    return %arg0, %c0_i32 : i32, i32
  }
  func.func @transform_3(%arg0: i32, %arg1: i32) -> (i32, i32) {
    %c0_i32 = arith.constant 0 : i32
    %c0_i32_0 = arith.constant 0 : i32
    return %c0_i32, %arg1 : i32, i32
  }
  func.func @transform_4(%arg0: i32, %arg1: i32) -> (i32, i32) {
    %c0_i32 = arith.constant 0 : i32
    %c0_i32_0 = arith.constant 0 : i32
    return %arg0, %c0_i32 : i32, i32
  }
}

</mosaic_0001>

<llo_original>
// kernel: tpu_custom_call.1
$region0: #{tpu_custom_call.1}
  #allocation0 [shape = 'u32[]', space=smem, size = 0x4, offset = 0x4, fixed_abs, tag = 'smem constant byte address 0x4 - core index']
  #allocation1 [shape = 'u32[144,128]{1,0:T(1,128)}', space=vmem, size = 0x12000, scoped, tag = 'internal scratch']
  #allocation2 [shape = 'f32[8,1]{1,0:T(8,128)}', space=vmem, size = 0x1000, scoped, tag = 'scratch operand']
  #allocation3 [shape = 'f32[8,1]{1,0:T(8,128)}', space=vmem, size = 0x1000, scoped, tag = 'scratch operand']
  #allocation4 [shape = 'f32[8,1]{1,0:T(8,128)}', space=vmem, size = 0x1000, scoped, tag = 'scratch operand']
  #allocation5 [shape = 'f32[8,1]{1,0:T(8,128)}', space=vmem, size = 0x1000, scoped, tag = 'scratch operand']
  %s0 = inlined_call_operand.vmem [shape: bf16[8,32], index: 0, kind: input, shape index: {}]
  %s1 = inlined_call_operand.vmem [shape: bf16[128,32], index: 1, kind: input, shape index: {}]
  %s2 = inlined_call_operand.vmem [shape: s32[8,1], index: 2, kind: input, shape index: {}]
  %s3 = inlined_call_operand.vmem [shape: s32[1,128], index: 3, kind: input, shape index: {}]
  %s4 = inlined_call_operand.vmem [shape: f32[8,1], index: 4, kind: output, shape index: {}]
  %s5 = sld [smem:[#allocation0]]
  $region34: #{tpu_custom_call.1} parent=0
    _
  %s7 = ssub.s32 1, %s5
  %s8 = scalar_select 0, %s7, %s5
  // Predicated region
  $region2: #{tpu_custom_call.1} parent=0 // pred_check
    _
  $region3: #{tpu_custom_call.1} parent=0 // pred_check_branch
    %10 = sbr.rel (0) target = $region5
  $region4: #{tpu_custom_call.1} parent=0 // pred_region
    _
  $region5: #{tpu_custom_call.1} parent=0 // pred_fallthru
    _
  // Predicated region
  $region6: #{tpu_custom_call.1} parent=0 // pred_check
    _
  $region7: #{tpu_custom_call.1} parent=0 // pred_check_branch
    %12 = sbr.rel (0) target = $region9
  $region8: #{tpu_custom_call.1} parent=0 // pred_region
    _
  $region9: #{tpu_custom_call.1} parent=0 // pred_fallthru
    _
  // Predicated region
  $region10: #{tpu_custom_call.1} parent=0 // pred_check
    _
  $region11: #{tpu_custom_call.1} parent=0 // pred_check_branch
    %14 = sbr.rel (0) target = $region13
  $region12: #{tpu_custom_call.1} parent=0 // pred_region
    _
  $region13: #{tpu_custom_call.1} parent=0 // pred_fallthru
    _
  // Predicated region
  $region14: #{tpu_custom_call.1} parent=0 // pred_check
    _
  $region15: #{tpu_custom_call.1} parent=0 // pred_check_branch
    %16 = sbr.rel (0) target = $region17
  $region16: #{tpu_custom_call.1} parent=0 // pred_region
    _
  $region17: #{tpu_custom_call.1} parent=0 // pred_fallthru
    _
  %p18 = scmp.eq.s32.totalorder 0, 0
  // Predicated region
  $region18: #{tpu_custom_call.1} parent=0 // pred_check
    %p19 = pneg %p18
  $region19: #{tpu_custom_call.1} parent=0 // pred_check_branch
    %21 = sbr.rel (%p19) target = $region21
  $region20: #{tpu_custom_call.1} parent=0 // pred_region
    %vm22 = vcmask 7168
    %23 = vst.msk [vmem:[#allocation2] sm:$0xff] %vm22, -inf
    %24 = vst.msk [vmem:[#allocation3] sm:$0xff] %vm22, 0.0
    %25 = vst.msk [vmem:[#allocation4] sm:$0xff] %vm22, 0.0
    %26 = vst.msk [vmem:[#allocation5] sm:$0xff] %vm22, 0.0
  $region21: #{tpu_custom_call.1} parent=0 // pred_fallthru
    _
  %v27 = vld [vmem:[%s0] sm:$0xf]
  %v28 = vld [vmem:[%s1] sm:$0xf]
  %v29 = vld [vmem:[%s1 + $0x4] sm:$0xf]
  %v30 = vld [vmem:[%s1 + $0x8] sm:$0xf]
  %v31 = vld [vmem:[%s1 + $0xc] sm:$0xf]
  %v32 = vld [vmem:[%s1 + $0x10] sm:$0xf]
  %v33 = vld [vmem:[%s1 + $0x14] sm:$0xf]
  %v34 = vld [vmem:[%s1 + $0x18] sm:$0xf]
  %v35 = vld [vmem:[%s1 + $0x1c] sm:$0xf]
  %v36 = vld [vmem:[%s1 + $0x20] sm:$0xf]
  %v37 = vld [vmem:[%s1 + $0x24] sm:$0xf]
  %v38 = vld [vmem:[%s1 + $0x28] sm:$0xf]
  %v39 = vld [vmem:[%s1 + $0x2c] sm:$0xf]
  %v40 = vld [vmem:[%s1 + $0x30] sm:$0xf]
  %v41 = vld [vmem:[%s1 + $0x34] sm:$0xf]
  %v42 = vld [vmem:[%s1 + $0x38] sm:$0xf]
  %v43 = vld [vmem:[%s1 + $0x3c] sm:$0xf]
  %v60 = vunpack.c.l.b16 %v28
  %v61 = vunpack.c.l.b16 %v29
  %v62 = vunpack.c.l.b16 %v30
  %v63 = vunpack.c.l.b16 %v31
  %v64 = vunpack.c.l.b16 %v32
  %v65 = vunpack.c.l.b16 %v33
  %v66 = vunpack.c.l.b16 %v34
  %v67 = vunpack.c.l.b16 %v35
  %v68 = vunpack.c.l.b16 %v36
  %v69 = vunpack.c.l.b16 %v37
  %v70 = vunpack.c.l.b16 %v38
  %v71 = vunpack.c.l.b16 %v39
  %v72 = vunpack.c.l.b16 %v40
  %v73 = vunpack.c.l.b16 %v41
  %v74 = vunpack.c.l.b16 %v42
  %v75 = vunpack.c.l.b16 %v43
  %v76 = vpack.c.b16 %v61, %v60
  %v77 = vpack.c.b16 %v63, %v62
  %v78 = vpack.c.b16 %v65, %v64
  %v79 = vpack.c.b16 %v67, %v66
  %v80 = vpack.c.b16 %v69, %v68
  %v81 = vpack.c.b16 %v71, %v70
  %v82 = vpack.c.b16 %v73, %v72
  %v83 = vpack.c.b16 %v75, %v74
  %vm84 = vcmask 261120
  %v86 = vsel %vm84, %v27, 0
  %v89 = vsel %vm84, %v76, 0
  %v92 = vsel %vm84, %v77, 0
  %v95 = vsel %vm84, %v78, 0
  %v98 = vsel %vm84, %v79, 0
  %v101 = vsel %vm84, %v80, 0
  %v104 = vsel %vm84, %v81, 0
  %v107 = vsel %vm84, %v82, 0
  %v110 = vsel %vm84, %v83, 0
  %112 = vmatprep.subr.bf16.mxu0 0
  %113 = vmatpush1.bf16.xpose.msra.mxu0 %v110
  %114 = vmatprep.subr.bf16.mxu0 0
  %115 = vmatpush1.bf16.xpose.msra.mxu0 %v107
  %116 = vmatprep.subr.bf16.mxu0 0
  %117 = vmatpush1.bf16.xpose.msra.mxu0 %v104
  %118 = vmatprep.subr.bf16.mxu0 0
  %119 = vmatpush1.bf16.xpose.msra.mxu0 %v101
  %120 = vmatprep.subr.bf16.mxu0 0
  %121 = vmatpush1.bf16.xpose.msra.mxu0 %v98
  %122 = vmatprep.subr.bf16.mxu0 0
  %123 = vmatpush1.bf16.xpose.msra.mxu0 %v95
  %124 = vmatprep.subr.bf16.mxu0 0
  %125 = vmatpush1.bf16.xpose.msra.mxu0 %v92
  %126 = vmatprep.subr.bf16.mxu0 0
  %127 = vmatpush1.bf16.xpose.msra.mxu0 %v89
  %128 = vmatprep.subr.bf16.mxu0 0
  %129 = vmatpush2.bf16.xpose.msra.mxu0 0
  %130 = vmatprep.subr.bf16.mxu0 0
  %131 = vmatpush2.bf16.xpose.msra.mxu0 0
  %132 = vmatprep.subr.bf16.mxu0 0
  %133 = vmatpush2.bf16.xpose.msra.mxu0 0
  %134 = vmatprep.subr.bf16.mxu0 0
  %135 = vmatpush2.bf16.xpose.msra.mxu0 0
  %136 = vmatprep.subr.bf16.mxu0 0
  %137 = vmatpush2.bf16.xpose.msra.mxu0 0
  %138 = vmatprep.subr.bf16.mxu0 0
  %139 = vmatpush2.bf16.xpose.msra.mxu0 0
  %140 = vmatprep.subr.bf16.mxu0 0
  %141 = vmatpush2.bf16.xpose.msra.mxu0 0
  %142 = vmatprep.subr.bf16.mxu0 0
  %143 = vmatpush2.bf16.xpose.msra.mxu0 0
  %144 = vmatprep.mubr.bf16.mxu0 0
  %145 = vmatmul.mubr.bf16.gmra.mxu0 %v86
  %v146 = vpop.f32.mrf.mxu0
  %v147 = vadd.f32 0.0, %v146
  %v148 = vpop.f32.mrf.mxu0
  %v149 = vpop.f32.mrf.mxu0
  %v150 = vpop.f32.mrf.mxu0
  %151 = vdwg.mxu0
  %v152 = vlaneseq
  %v153 = vand.u32 %v152, 127
  %v154 = vlaneseq
  %v155 = vshrl.u32 %v154, 7
  %v156 = vsub.s32 %v153, %v155
  %s157 = smul.u32 0, 8
  %s158 = smul.u32 0, 128
  %s159 = ssub.s32 %s157, %s158
  %v160 = vstv %s159
  %vm161 = vcmp.ne.s32.totalorder %v156, %v160
  %s162 = ssub.s32 16, %s158
  %v163 = vstv %s162
  %vm164 = vcmp.lt.s32.totalorder %v153, %v163
  %vm165 = vmand %vm161, %vm164
  %v166 = vld [vmem:[%s2] sm:$0xff]
  %v167 = vld [vmem:[%s3] sm:$0x1]
  %168 = vset.pattern.permute.xlu0 0
  %169 = vperm.xlu0 %168, %v166
  %v170 = vpop.permute.xlu0 %169
  %v171 = vlaneseq
  %v172 = vshrl.u32 %v171, 7
  %v173 = vsub.s32 0, %v172
  %v174 = vrot.slane %v167, %v173
  %vm175 = vcmp.eq.s32.totalorder %v170, %v174
  %vm176 = vmand %vm175, %vm165
  %v177 = vsel %vm176, 1, 0
  %v178 = vcvt.s32.f32 %v177
  %v179 = vsel %vm165, 1, 0
  %v180 = vcvt.s32.f32 %v179
  %v181 = vld [vmem:[#allocation2] sm:$0xff]
  %182 = vmax.xlane.f32.xlu0 %v147
  %v183 = vpop.xlane.xlu0 %182
  %v184 = vmax.f32 %v181, %v183
  %v185 = vsub.f32 %v181, %v184
  %v186 = vmul.f32 %v185, 1.442695
  %v187 = vpow.pop %v186
  %v188 = vld [vmem:[#allocation3] sm:$0xff]
  %v189 = vmul.f32 %v187, %v188
  %191 = vset.pattern.permute.xlu0 0
  %192 = vperm.xlu0 %191, %v184
  %v193 = vpop.permute.xlu0 %192
  %v195 = vsub.f32 %v147, %v193
  %v196 = vmul.f32 %v195, 1.442695
  %v197 = vpow.pop %v196
  %v198 = vmul.f32 %v197, %v180
  %199 = vadd.xlane.f32.xlu0 %v198
  %v200 = vpop.xlane.xlu0 %199
  %v201 = vadd.f32 %v189, %v200
  %vm202 = vcmask 7168
  %203 = vst.msk [vmem:[#allocation3] sm:$0xff] %vm202, %v201
  %204 = vst.msk [vmem:[#allocation2] sm:$0xff] %vm202, %v184
  %v205 = vld [vmem:[#allocation4] sm:$0xff]
  %v206 = vmul.f32 %v178, %v147
  %207 = vadd.xlane.f32.xlu0 %v206
  %v208 = vpop.xlane.xlu0 %207
  %v209 = vadd.f32 %v205, %v208
  %210 = vst.msk [vmem:[#allocation4] sm:$0xff] %vm202, %v209
  %v211 = vld [vmem:[#allocation5] sm:$0xff]
  %212 = vadd.xlane.f32.xlu0 %v178
  %v213 = vpop.xlane.xlu0 %212
  %v214 = vadd.f32 %v211, %v213
  %215 = vst.msk [vmem:[#allocation5] sm:$0xff] %vm202, %v214
  // Predicated region
  $region22: #{tpu_custom_call.1} parent=0 // pred_check
    %p216 = pneg %p18
  $region23: #{tpu_custom_call.1} parent=0 // pred_check_branch
    %218 = sbr.rel (%p216) target = $region25
  $region24: #{tpu_custom_call.1} parent=0 // pred_region
    %v219 = vld [vmem:[#allocation2] sm:$0xff]
    %v220 = vld [vmem:[#allocation3] sm:$0xff]
    %v221 = vlog2.pop %v220
    %v222 = vmul.f32 %v221, 0.6931472
    %v223 = vadd.f32 %v219, %v222
    %v224 = vld [vmem:[#allocation4] sm:$0xff]
    %v225 = vld [vmem:[#allocation5] sm:$0xff]
    %v226 = vrcp.pop %v225
    %v227 = vmul.f32 %v224, %v226
    %v228 = vsub.f32 %v227, %v223
    %v229 = vmul.f32 %v228, -0.5
    %230 = vst.msk [vmem:[%s4] sm:$0xff] %vm202, %v229
  $region25: #{tpu_custom_call.1} parent=0 // pred_fallthru
    _
  // Predicated region
  $region26: #{tpu_custom_call.1} parent=0 // pred_check
    _
  $region27: #{tpu_custom_call.1} parent=0 // pred_check_branch
    %232 = sbr.rel (0) target = $region29
  $region28: #{tpu_custom_call.1} parent=0 // pred_region
    _
  $region29: #{tpu_custom_call.1} parent=0 // pred_fallthru
    _
  // Predicated region
  $region30: #{tpu_custom_call.1} parent=0 // pred_check
    _
  $region31: #{tpu_custom_call.1} parent=0 // pred_check_branch
    %234 = sbr.rel (0) target = $region33
  $region32: #{tpu_custom_call.1} parent=0 // pred_region
    _
  $region33: #{tpu_custom_call.1} parent=0 // pred_fallthru
    _

</llo_original>
